<compile_context>
chip_gen: v6e
topology: v6e:2x2x1
jax: 0.10.0
libtpu: 0.0.40
codegen_flags: <defaults>
</compile_context>

<pallas_src>
import jax
import jax.numpy as jnp
from jax.experimental import pallas as pl
from jax.experimental.pallas import tpu as pltpu


def _round_up(n, m):
    return ((n + m - 1) // m) * m


def fc1024_kernel(x_ref, w1_ref, w2_ref, w3_ref, o_ref):
    # Layer 1: conv1x1(784 -> H) + ReLU.  bf16 operands, f32 accumulation.
    h = jnp.dot(x_ref[...], w1_ref[...], preferred_element_type=jnp.float32)
    h = jnp.maximum(h, 0.0).astype(jnp.bfloat16)
    # Layer 2: conv1x1(H -> H) + ReLU
    h = jnp.dot(h, w2_ref[...], preferred_element_type=jnp.float32)
    h = jnp.maximum(h, 0.0).astype(jnp.bfloat16)
    # Layer 3: conv1x1(H -> num_classes), no activation (last_layer)
    out = jnp.dot(h, w3_ref[...], preferred_element_type=jnp.float32)
    o_ref[...] = out.astype(o_ref.dtype)


def prepare_fc1024_weights(w1, w2, w3):
    """One-time (init-time) weight prep: cast to bf16 and pad the lane dims.

    w1: (784, H), w2: (H, H), w3: (H, C), any float dtype, stored (in, out).
    Returns bf16 arrays (784, H_P), (H_P, H_P), (H_P, C_P).  Padded rows/cols
    are exactly zero so they contribute nothing through the (bias-free) MLP.
    """
    IN, H = w1.shape
    C = w3.shape[1]
    H_P = _round_up(H, 128)
    C_P = _round_up(max(C, 128), 128)  # lane-dense output block (>= 128)
    w1_p = jnp.zeros((IN, H_P), jnp.bfloat16).at[:, :H].set(w1.astype(jnp.bfloat16))
    w2_p = jnp.zeros((H_P, H_P), jnp.bfloat16).at[:H, :H].set(w2.astype(jnp.bfloat16))
    w3_p = jnp.zeros((H_P, C_P), jnp.bfloat16).at[:H, :C].set(w3.astype(jnp.bfloat16))
    return w1_p, w2_p, w3_p


def fc1024_forward(x, w1_p, w2_p, w3_p, *, num_classes, tb=512):
    """x: (B, 1, 28, 28) or (B, 784); weights already prepared (bf16, padded)."""
    B = x.shape[0]
    IN = w1_p.shape[0]          # 784, not padded (full-array last dim of x)
    H_P = w2_p.shape[0]
    C_P = w3_p.shape[1]
    C = num_classes

    # == x.view(B, 784, 1, 1) with the 1x1 spatial dims dropped; bf16 for MXU.
    x_flat = x.reshape(B, IN).astype(jnp.bfloat16)

    # Batch tiling: balance tiles to minimize last-tile padding, keep TB a
    # sublane multiple, and keep >= 2 grid steps when B allows so the
    # "parallel" grid axis can be sharded across both v7x TensorCores.
    n_steps = max(pl.cdiv(B, tb), min(2, pl.cdiv(B, 8)))
    TB = _round_up(pl.cdiv(B, n_steps), 8)
    B_P = _round_up(B, TB)
    grid = (B_P // TB,)

    if B_P == B:
        x_p = x_flat
    else:
        x_p = jnp.zeros((B_P, IN), jnp.bfloat16).at[:B, :].set(x_flat)

    flops = 2 * B_P * (IN * H_P + H_P * H_P + H_P * C_P)
    bytes_accessed = (x_p.size + w1_p.size + w2_p.size + w3_p.size
                      + B_P * C_P) * 2  # all bf16

    out_p = pl.pallas_call(
        fc1024_kernel,
        out_shape=jax.ShapeDtypeStruct((B_P, C_P), jnp.bfloat16),
        grid=grid,
        in_specs=[
            # Batch-tiled activations (double-buffered by default).
            pl.BlockSpec((TB, IN), lambda i: (i, 0)),
            # Weights: grid-invariant index_map -> stay VMEM-resident; single
            # buffer (no re-fetch ever happens) to halve their VMEM footprint.
            pl.BlockSpec((IN, H_P), lambda i: (0, 0),
                         pipeline_mode=pl.Buffered(1)),
            pl.BlockSpec((H_P, H_P), lambda i: (0, 0),
                         pipeline_mode=pl.Buffered(1)),
            pl.BlockSpec((H_P, C_P), lambda i: (0, 0),
                         pipeline_mode=pl.Buffered(1)),
        ],
        out_specs=pl.BlockSpec((TB, C_P), lambda i: (i, 0)),
        compiler_params=pltpu.CompilerParams(
            dimension_semantics=("parallel",),
            vmem_limit_bytes=48 * 1024 * 1024),
        cost_estimate=pl.CostEstimate(
            flops=flops, transcendentals=0, bytes_accessed=bytes_accessed),
    )(x_p, w1_p, w2_p, w3_p)

    out = out_p[:B, :C]
    # PyTorch's .squeeze(): drops the 1x1 spatial dims (already gone here) and
    # also drops the batch dim if B == 1.
    return jnp.squeeze(out) if B == 1 else out


if __name__ == "__main__":
    key = jax.random.PRNGKey(0)

    B = 2
    width_mult = 0.25                 # small width for the example
    IN = 28 * 28                      # 784, fixed by the module
    H = int(width_mult * 1024)        # 256
    num_classes = 10

    kx, k1, k2, k3 = jax.random.split(key, 4)

    # Deterministic "conv1x1" weight init (kaiming-uniform-style bound
    # 1/sqrt(fan_in)), stored transposed as (in, out).
    def init_w(k, fan_in, fan_out):
        bound = 1.0 / (fan_in ** 0.5)
        return jax.random.uniform(k, (fan_in, fan_out), jnp.float32, -bound, bound)

    x = jax.random.normal(kx, (B, 1, 28, 28), jnp.float32)  # NCHW, like torch
    w1 = init_w(k1, IN, H)
    w2 = init_w(k2, H, H)
    w3 = init_w(k3, H, num_classes)

    # Hoisted, one-time weight prep (would live next to parameter init).
    w1_p, w2_p, w3_p = prepare_fc1024_weights(w1, w2, w3)
    w1_p, w2_p, w3_p = jax.block_until_ready((w1_p, w2_p, w3_p))

    out = fc1024_forward(x, w1_p, w2_p, w3_p, num_classes=num_classes)
    out = jax.block_until_ready(out)
    assert out.shape == (B, num_classes), out.shape
    out_f32 = out.astype(jnp.float32)

    # Reference 1: same bf16-operand / f32-accumulate recipe, plain JAX
    # (kernel output is bf16, so allow one extra quantization step).
    xb = x.reshape(B, IN).astype(jnp.bfloat16)
    w1b, w2b, w3b = (w.astype(jnp.bfloat16) for w in (w1, w2, w3))
    ref = jnp.maximum(jnp.dot(xb, w1b, preferred_element_type=jnp.float32), 0.0)
    ref = jnp.maximum(
        jnp.dot(ref.astype(jnp.bfloat16), w2b, preferred_element_type=jnp.float32), 0.0)
    ref = jnp.dot(ref.astype(jnp.bfloat16), w3b, preferred_element_type=jnp.float32)
    assert jnp.allclose(out_f32, ref, atol=1e-2, rtol=1e-2), \
        jnp.max(jnp.abs(out_f32 - ref))

    # Reference 2: full-f32 math, loose tolerance (bf16 operand quantization).
    ref32 = jnp.maximum(x.reshape(B, IN) @ w1, 0.0)
    ref32 = jnp.maximum(ref32 @ w2, 0.0)
    ref32 = ref32 @ w3
    assert jnp.allclose(out_f32, ref32, atol=6e-2, rtol=6e-2), \
        jnp.max(jnp.abs(out_f32 - ref32))

    print("KERNEL_OK")
</pallas_src>

<mosaic_0001>
module attributes {stable_mosaic.version = 11 : i64} {
  func.func @fc1024_kernel(%arg0: i32, %arg1: memref<8x784xbf16, #tpu.memory_space<vmem>>, %arg2: memref<784x256xbf16, #tpu.memory_space<vmem>>, %arg3: memref<256x256xbf16, #tpu.memory_space<vmem>>, %arg4: memref<256x128xbf16, #tpu.memory_space<vmem>>, %arg5: memref<8x128xbf16, #tpu.memory_space<vmem>>) attributes {dimension_semantics = [#tpu.dimension_semantics<parallel>], iteration_bounds = array<i64: 1>, scalar_prefetch = 0 : i64, scratch_operands = 0 : i64, tpu.core_type = #tpu.core_type<tc>, window_params = [{transform_indices = @transform_0, window_bounds = array<i64: 8, 784>}, {pipeline_mode = #tpu.pipeline_mode<synchronous>, transform_indices = @transform_1, window_bounds = array<i64: 784, 256>}, {pipeline_mode = #tpu.pipeline_mode<synchronous>, transform_indices = @transform_2, window_bounds = array<i64: 256, 256>}, {pipeline_mode = #tpu.pipeline_mode<synchronous>, transform_indices = @transform_3, window_bounds = array<i64: 256, 128>}, {transform_indices = @transform_4, window_bounds = array<i64: 8, 128>}]} {
    %c0 = arith.constant 0 : index
    %c0_0 = arith.constant 0 : index
    %0 = vector.load %arg1[%c0, %c0_0] : memref<8x784xbf16, #tpu.memory_space<vmem>>, vector<8x784xbf16>
    %c0_1 = arith.constant 0 : index
    %c0_2 = arith.constant 0 : index
    %1 = vector.load %arg2[%c0_1, %c0_2] : memref<784x256xbf16, #tpu.memory_space<vmem>>, vector<784x256xbf16>
    %cst = arith.constant dense<0.000000e+00> : vector<8x256xf32>
    %2 = tpu.matmul %0, %1, %cst {dimension_numbers = #tpu.dot_dimension_numbers<[1], [0], [0], [1], [0, 0, 1, 1], [], []>} : vector<8x784xbf16>, vector<784x256xbf16>, vector<8x256xf32> -> vector<8x256xf32>
    %cst_3 = arith.constant 0.000000e+00 : f32
    %3 = vector.broadcast %cst_3 : f32 to vector<8x256xf32>
    %4 = arith.maximumf %2, %3 : vector<8x256xf32>
    %5 = arith.truncf %4 : vector<8x256xf32> to vector<8x256xbf16>
    %c0_4 = arith.constant 0 : index
    %c0_5 = arith.constant 0 : index
    %6 = vector.load %arg3[%c0_4, %c0_5] : memref<256x256xbf16, #tpu.memory_space<vmem>>, vector<256x256xbf16>
    %cst_6 = arith.constant dense<0.000000e+00> : vector<8x256xf32>
    %7 = tpu.matmul %5, %6, %cst_6 {dimension_numbers = #tpu.dot_dimension_numbers<[1], [0], [0], [1], [0, 0, 1, 1], [], []>} : vector<8x256xbf16>, vector<256x256xbf16>, vector<8x256xf32> -> vector<8x256xf32>
    %cst_7 = arith.constant 0.000000e+00 : f32
    %8 = vector.broadcast %cst_7 : f32 to vector<8x256xf32>
    %9 = arith.maximumf %7, %8 : vector<8x256xf32>
    %10 = arith.truncf %9 : vector<8x256xf32> to vector<8x256xbf16>
    %c0_8 = arith.constant 0 : index
    %c0_9 = arith.constant 0 : index
    %11 = vector.load %arg4[%c0_8, %c0_9] : memref<256x128xbf16, #tpu.memory_space<vmem>>, vector<256x128xbf16>
    %cst_10 = arith.constant dense<0.000000e+00> : vector<8x128xf32>
    %12 = tpu.matmul %10, %11, %cst_10 {dimension_numbers = #tpu.dot_dimension_numbers<[1], [0], [0], [1], [0, 0, 1, 1], [], []>} : vector<8x256xbf16>, vector<256x128xbf16>, vector<8x128xf32> -> vector<8x128xf32>
    %13 = arith.truncf %12 : vector<8x128xf32> to vector<8x128xbf16>
    %c0_11 = arith.constant 0 : index
    %c0_12 = arith.constant 0 : index
    %14 = vector.load %arg5[%c0_11, %c0_12] : memref<8x128xbf16, #tpu.memory_space<vmem>>, vector<8x128xbf16>
    tpu.vector_store %arg5[%c0_11, %c0_12], %13 {strides = array<i32>} : memref<8x128xbf16, #tpu.memory_space<vmem>>, vector<8x128xbf16>,
    return
  }
  func.func @transform_0(%arg0: i32) -> (i32, i32) {
    %c0_i32 = arith.constant 0 : i32
    %c0_i32_0 = arith.constant 0 : i32
    return %arg0, %c0_i32 : i32, i32
  }
  func.func @transform_1(%arg0: i32) -> (i32, i32) {
    %c0_i32 = arith.constant 0 : i32
    %c0_i32_0 = arith.constant 0 : i32
    %c0_i32_1 = arith.constant 0 : i32
    return %c0_i32, %c0_i32_0 : i32, i32
  }
  func.func @transform_2(%arg0: i32) -> (i32, i32) {
    %c0_i32 = arith.constant 0 : i32
    %c0_i32_0 = arith.constant 0 : i32
    %c0_i32_1 = arith.constant 0 : i32
    return %c0_i32, %c0_i32_0 : i32, i32
  }
  func.func @transform_3(%arg0: i32) -> (i32, i32) {
    %c0_i32 = arith.constant 0 : i32
    %c0_i32_0 = arith.constant 0 : i32
    %c0_i32_1 = arith.constant 0 : i32
    return %c0_i32, %c0_i32_0 : i32, i32
  }
  func.func @transform_4(%arg0: i32) -> (i32, i32) {
    %c0_i32 = arith.constant 0 : i32
    %c0_i32_0 = arith.constant 0 : i32
    return %arg0, %c0_i32 : i32, i32
  }
}

</mosaic_0001>

<llo_original>
// kernel: tpu_custom_call.1
$region0: #{tpu_custom_call.1}
  #allocation0 [shape = 'u32[]', space=smem, size = 0x4, offset = 0x4, fixed_abs, tag = 'smem constant byte address 0x4 - core index']
  #allocation1 [shape = 'u32[144,128]{1,0:T(1,128)}', space=vmem, size = 0x12000, scoped, tag = 'internal scratch']
  %s0 = inlined_call_operand.hbm [shape: bf16[8,784], index: 0, kind: input, shape index: {}]
  %s1 = inlined_call_operand.hbm [shape: bf16[784,256], index: 1, kind: input, shape index: {}]
  %s2 = inlined_call_operand.hbm [shape: bf16[256,256], index: 2, kind: input, shape index: {}]
  %s3 = inlined_call_operand.hbm [shape: bf16[256,128], index: 3, kind: input, shape index: {}]
  %s4 = inlined_call_operand.hbm [shape: bf16[8,128], index: 4, kind: output, shape index: {}]
  %s5 = sld [smem:[#allocation0]]
  $region42: #{tpu_custom_call.1} parent=0
    _
  %s7 = ssub.s32 1, %s5
  %s8 = scalar_select 0, %s7, %s5
  $region1: #{tpu_custom_call.1} parent=0
    #allocation2 [shape = 'u8[14336]{0}', space=vmem, size = 0x3800, scoped, tag = 'input window, operand 0, single buffered']
    #allocation3 [shape = 's32[1]{0}', space=sflag, size = 0x4, scoped, tag = 'scoped memory for tpu_custom_call.1']
    #allocation4 [shape = 's32[1]{0}', space=sflag, size = 0x4, scoped, tag = 'scoped memory for tpu_custom_call.1']
    #allocation5 [shape = 'u8[401408]{0}', space=vmem, size = 0x62000, scoped, tag = 'input window, operand 1, single buffered']
    #allocation6 [shape = 's32[1]{0}', space=sflag, size = 0x4, scoped, tag = 'scoped memory for tpu_custom_call.1']
    #allocation7 [shape = 'u8[131072]{0}', space=vmem, size = 0x20000, scoped, tag = 'input window, operand 2, single buffered']
    #allocation8 [shape = 'u8[65536]{0}', space=vmem, size = 0x10000, scoped, tag = 'input window, operand 3, single buffered']
    #allocation9 [shape = 's32[1]{0}', space=sflag, size = 0x4, scoped, tag = 'scoped memory for tpu_custom_call.1']
    #allocation10 [shape = 'u8[2048]{0}', space=vmem, size = 0x800, scoped, tag = 'output window, operand 0, single buffered']
    %9 = vsyncpa [#allocation3], 0
    %10 = vsyncpa [#allocation6], 0
    %11 = vsyncpa [#allocation9], 0
    %12 = vsyncpa [#allocation4], 0
    // Predicated region
    $region2: #{tpu_custom_call.1} parent=1 // pred_check
      _
    $region3: #{tpu_custom_call.1} parent=1 // pred_check_branch
      %14 = sbr.rel (0) target = $region5
    $region4: #{tpu_custom_call.1} parent=1 // pred_region
      %s16 = ssub.s32 448, 448
      %17 = vsyncadd [#allocation3], %s16
      %s19 = sshll.u32 [#allocation2], 4
      %s20 = int_to_ptr.vmem [resolvable:$true] %s19
      %22 = dma.hbm_to_vmem [thread:$0]  %s0, 448, %s20, [#allocation3]
    $region5: #{tpu_custom_call.1} parent=1 // pred_fallthru
      _
    // Predicated region
    $region6: #{tpu_custom_call.1} parent=1 // pred_check
      _
    $region7: #{tpu_custom_call.1} parent=1 // pred_check_branch
      %24 = sbr.rel (0) target = $region9
    $region8: #{tpu_custom_call.1} parent=1 // pred_region
      %s26 = ssub.s32 12544, 12544
      %27 = vsyncadd [#allocation6], %s26
      %s28 = sshll.u32 [#allocation5], 4
      %s29 = int_to_ptr.vmem [resolvable:$true] %s28
      %34 = dma.hbm_to_vmem [thread:$0]  %s1, 12544, %s29, [#allocation6], 128, 128, 8
    $region9: #{tpu_custom_call.1} parent=1 // pred_fallthru
      _
    // Predicated region
    $region10: #{tpu_custom_call.1} parent=1 // pred_check
      _
    $region11: #{tpu_custom_call.1} parent=1 // pred_check_branch
      %36 = sbr.rel (0) target = $region13
    $region12: #{tpu_custom_call.1} parent=1 // pred_region
      %s38 = ssub.s32 4096, 4096
      %39 = vsyncadd [#allocation6], %s38
      %s40 = sshll.u32 [#allocation7], 4
      %s41 = int_to_ptr.vmem [resolvable:$true] %s40
      %46 = dma.hbm_to_vmem [thread:$0]  %s2, 4096, %s41, [#allocation6], 128, 128, 8
    $region13: #{tpu_custom_call.1} parent=1 // pred_fallthru
      _
    // Predicated region
    $region14: #{tpu_custom_call.1} parent=1 // pred_check
      _
    $region15: #{tpu_custom_call.1} parent=1 // pred_check_branch
      %48 = sbr.rel (0) target = $region17
    $region16: #{tpu_custom_call.1} parent=1 // pred_region
      %s50 = ssub.s32 2048, 2048
      %51 = vsyncadd [#allocation9], %s50
      %s52 = sshll.u32 [#allocation8], 4
      %s53 = int_to_ptr.vmem [resolvable:$true] %s52
      %58 = dma.hbm_to_vmem [thread:$0]  %s3, 2048, %s53, [#allocation9], 64, 64, 4
    $region17: #{tpu_custom_call.1} parent=1 // pred_fallthru
      _
    // Predicated region
    $region18: #{tpu_custom_call.1} parent=1 // pred_check
      _
    $region19: #{tpu_custom_call.1} parent=1 // pred_check_branch
      %60 = sbr.rel (0) target = $region21
    $region20: #{tpu_custom_call.1} parent=1 // pred_region
      %61 = dma.done [#allocation3], 448
    $region21: #{tpu_custom_call.1} parent=1 // pred_fallthru
      _
    // Predicated region
    $region22: #{tpu_custom_call.1} parent=1 // pred_check
      _
    $region23: #{tpu_custom_call.1} parent=1 // pred_check_branch
      %63 = sbr.rel (0) target = $region25
    $region24: #{tpu_custom_call.1} parent=1 // pred_region
      %64 = dma.done [#allocation6], 12544
    $region25: #{tpu_custom_call.1} parent=1 // pred_fallthru
      _
    // Predicated region
    $region26: #{tpu_custom_call.1} parent=1 // pred_check
      _
    $region27: #{tpu_custom_call.1} parent=1 // pred_check_branch
      %66 = sbr.rel (0) target = $region29
    $region28: #{tpu_custom_call.1} parent=1 // pred_region
      %67 = dma.done [#allocation6], 4096
    $region29: #{tpu_custom_call.1} parent=1 // pred_fallthru
      _
    // Predicated region
    $region30: #{tpu_custom_call.1} parent=1 // pred_check
      _
    $region31: #{tpu_custom_call.1} parent=1 // pred_check_branch
      %69 = sbr.rel (0) target = $region33
    $region32: #{tpu_custom_call.1} parent=1 // pred_region
      %70 = dma.done [#allocation9], 2048
    $region33: #{tpu_custom_call.1} parent=1 // pred_fallthru
      _
    %v72 = vld [vmem:[#allocation2] sm:$0xff]
    %v73 = vld [vmem:[#allocation2 + $0x8] sm:$0xff]
    %v74 = vld [vmem:[#allocation2 + $0x10] sm:$0xff]
    %v75 = vld [vmem:[#allocation2 + $0x18] sm:$0xf]
    %v76 = vld [vmem:[#allocation5] sm:$0xff]
    %v77 = vld [vmem:[#allocation5 + $0x8] sm:$0xff]
    %v78 = vld [vmem:[#allocation5 + $0x10] sm:$0xff]
    %v79 = vld [vmem:[#allocation5 + $0x18] sm:$0xff]
    %v80 = vld [vmem:[#allocation5 + $0x20] sm:$0xff]
    %v81 = vld [vmem:[#allocation5 + $0x28] sm:$0xff]
    %v82 = vld [vmem:[#allocation5 + $0x30] sm:$0xff]
    %v83 = vld [vmem:[#allocation5 + $0x38] sm:$0xff]
    %v84 = vld [vmem:[#allocation5 + $0x40] sm:$0xff]
    %v85 = vld [vmem:[#allocation5 + $0x48] sm:$0xff]
    %v86 = vld [vmem:[#allocation5 + $0x50] sm:$0xff]
    %v87 = vld [vmem:[#allocation5 + $0x58] sm:$0xff]
    %v88 = vld [vmem:[#allocation5 + $0x60] sm:$0xff]
    %v89 = vld [vmem:[#allocation5 + $0x68] sm:$0xff]
    %v90 = vld [vmem:[#allocation5 + $0x70] sm:$0xff]
    %v91 = vld [vmem:[#allocation5 + $0x78] sm:$0xff]
    %v92 = vld [vmem:[#allocation5 + $0x80] sm:$0xff]
    %v93 = vld [vmem:[#allocation5 + $0x88] sm:$0xff]
    %v94 = vld [vmem:[#allocation5 + $0x90] sm:$0xff]
    %v95 = vld [vmem:[#allocation5 + $0x98] sm:$0xff]
    %v96 = vld [vmem:[#allocation5 + $0xa0] sm:$0xff]
    %v97 = vld [vmem:[#allocation5 + $0xa8] sm:$0xff]
    %v98 = vld [vmem:[#allocation5 + $0xb0] sm:$0xff]
    %v99 = vld [vmem:[#allocation5 + $0xb8] sm:$0xff]
    %v100 = vld [vmem:[#allocation5 + $0xc0] sm:$0xff]
    %v101 = vld [vmem:[#allocation5 + $0xc8] sm:$0xff]
    %v102 = vld [vmem:[#allocation5 + $0xd0] sm:$0xff]
    %v103 = vld [vmem:[#allocation5 + $0xd8] sm:$0xff]
    %v104 = vld [vmem:[#allocation5 + $0xe0] sm:$0xff]
    %v105 = vld [vmem:[#allocation5 + $0xe8] sm:$0xff]
    %v106 = vld [vmem:[#allocation5 + $0xf0] sm:$0xff]
    %v107 = vld [vmem:[#allocation5 + $0xf8] sm:$0xff]
    %v108 = vld [vmem:[#allocation5 + $0x100] sm:$0xff]
    %v109 = vld [vmem:[#allocation5 + $0x108] sm:$0xff]
    %v110 = vld [vmem:[#allocation5 + $0x110] sm:$0xff]
    %v111 = vld [vmem:[#allocation5 + $0x118] sm:$0xff]
    %v112 = vld [vmem:[#allocation5 + $0x120] sm:$0xff]
    %v113 = vld [vmem:[#allocation5 + $0x128] sm:$0xff]
    %v114 = vld [vmem:[#allocation5 + $0x130] sm:$0xff]
    %v115 = vld [vmem:[#allocation5 + $0x138] sm:$0xff]
    %v116 = vld [vmem:[#allocation5 + $0x140] sm:$0xff]
    %v117 = vld [vmem:[#allocation5 + $0x148] sm:$0xff]
    %v118 = vld [vmem:[#allocation5 + $0x150] sm:$0xff]
    %v119 = vld [vmem:[#allocation5 + $0x158] sm:$0xff]
    %v120 = vld [vmem:[#allocation5 + $0x160] sm:$0xff]
    %v121 = vld [vmem:[#allocation5 + $0x168] sm:$0xff]
    %v122 = vld [vmem:[#allocation5 + $0x170] sm:$0xff]
    %v123 = vld [vmem:[#allocation5 + $0x178] sm:$0xff]
    %v124 = vld [vmem:[#allocation5 + $0x180] sm:$0xff]
    %v125 = vld [vmem:[#allocation5 + $0x188] sm:$0xff]
    %v126 = vld [vmem:[#allocation5 + $0x190] sm:$0xff]
    %v127 = vld [vmem:[#allocation5 + $0x198] sm:$0xff]
    %v128 = vld [vmem:[#allocation5 + $0x1a0] sm:$0xff]
    %v129 = vld [vmem:[#allocation5 + $0x1a8] sm:$0xff]
    %v130 = vld [vmem:[#allocation5 + $0x1b0] sm:$0xff]
    %v131 = vld [vmem:[#allocation5 + $0x1b8] sm:$0xff]
    %v132 = vld [vmem:[#allocation5 + $0x1c0] sm:$0xff]
    %v133 = vld [vmem:[#allocation5 + $0x1c8] sm:$0xff]
    %v134 = vld [vmem:[#allocation5 + $0x1d0] sm:$0xff]
    %v135 = vld [vmem:[#allocation5 + $0x1d8] sm:$0xff]
    %v136 = vld [vmem:[#allocation5 + $0x1e0] sm:$0xff]
    %v137 = vld [vmem:[#allocation5 + $0x1e8] sm:$0xff]
    %v138 = vld [vmem:[#allocation5 + $0x1f0] sm:$0xff]
    %v139 = vld [vmem:[#allocation5 + $0x1f8] sm:$0xff]
    %v140 = vld [vmem:[#allocation5 + $0x200] sm:$0xff]
    %v141 = vld [vmem:[#allocation5 + $0x208] sm:$0xff]
    %v142 = vld [vmem:[#allocation5 + $0x210] sm:$0xff]
    %v143 = vld [vmem:[#allocation5 + $0x218] sm:$0xff]
    %v144 = vld [vmem:[#allocation5 + $0x220] sm:$0xff]
    %v145 = vld [vmem:[#allocation5 + $0x228] sm:$0xff]
    %v146 = vld [vmem:[#allocation5 + $0x230] sm:$0xff]
    %v147 = vld [vmem:[#allocation5 + $0x238] sm:$0xff]
    %v148 = vld [vmem:[#allocation5 + $0x240] sm:$0xff]
    %v149 = vld [vmem:[#allocation5 + $0x248] sm:$0xff]
    %v150 = vld [vmem:[#allocation5 + $0x250] sm:$0xff]
    %v151 = vld [vmem:[#allocation5 + $0x258] sm:$0xff]
    %v152 = vld [vmem:[#allocation5 + $0x260] sm:$0xff]
    %v153 = vld [vmem:[#allocation5 + $0x268] sm:$0xff]
    %v154 = vld [vmem:[#allocation5 + $0x270] sm:$0xff]
    %v155 = vld [vmem:[#allocation5 + $0x278] sm:$0xff]
    %v156 = vld [vmem:[#allocation5 + $0x280] sm:$0xff]
    %v157 = vld [vmem:[#allocation5 + $0x288] sm:$0xff]
    %v158 = vld [vmem:[#allocation5 + $0x290] sm:$0xff]
    %v159 = vld [vmem:[#allocation5 + $0x298] sm:$0xff]
    %v160 = vld [vmem:[#allocation5 + $0x2a0] sm:$0xff]
    %v161 = vld [vmem:[#allocation5 + $0x2a8] sm:$0xff]
    %v162 = vld [vmem:[#allocation5 + $0x2b0] sm:$0xff]
    %v163 = vld [vmem:[#allocation5 + $0x2b8] sm:$0xff]
    %v164 = vld [vmem:[#allocation5 + $0x2c0] sm:$0xff]
    %v165 = vld [vmem:[#allocation5 + $0x2c8] sm:$0xff]
    %v166 = vld [vmem:[#allocation5 + $0x2d0] sm:$0xff]
    %v167 = vld [vmem:[#allocation5 + $0x2d8] sm:$0xff]
    %v168 = vld [vmem:[#allocation5 + $0x2e0] sm:$0xff]
    %v169 = vld [vmem:[#allocation5 + $0x2e8] sm:$0xff]
    %v170 = vld [vmem:[#allocation5 + $0x2f0] sm:$0xff]
    %v171 = vld [vmem:[#allocation5 + $0x2f8] sm:$0xff]
    %v172 = vld [vmem:[#allocation5 + $0x300] sm:$0xff]
    %v173 = vld [vmem:[#allocation5 + $0x308] sm:$0xff]
    %v178 = vunpack.c.l.b16 %v72
    %v179 = vunpack.c.h.b16 %v72
    %v180 = vunpack.c.l.b16 %v73
    %v181 = vunpack.c.h.b16 %v73
    %v182 = vunpack.c.l.b16 %v74
    %v183 = vunpack.c.h.b16 %v74
    %v184 = vunpack.c.l.b16 %v75
    %v185 = vpack.c.b16 %v178, %v178
    %v186 = vpack.c.b16 %v179, %v179
    %v187 = vpack.c.b16 %v180, %v180
    %v188 = vpack.c.b16 %v181, %v181
    %v189 = vpack.c.b16 %v182, %v182
    %v190 = vpack.c.b16 %v183, %v183
    %v191 = vpack.c.b16 %v184, %v184
    %v296 = vunpack.c.l.b16 %v76
    %v297 = vunpack.c.h.b16 %v76
    %v298 = vunpack.c.l.b16 %v77
    %v299 = vunpack.c.h.b16 %v77
    %v300 = vunpack.c.l.b16 %v78
    %v301 = vunpack.c.h.b16 %v78
    %v302 = vunpack.c.l.b16 %v79
    %v303 = vunpack.c.h.b16 %v79
    %v304 = vunpack.c.l.b16 %v80
    %v305 = vunpack.c.h.b16 %v80
    %v306 = vunpack.c.l.b16 %v81
    %v307 = vunpack.c.h.b16 %v81
    %v308 = vunpack.c.l.b16 %v82
    %v309 = vunpack.c.h.b16 %v82
    %v310 = vunpack.c.l.b16 %v83
    %v311 = vunpack.c.h.b16 %v83
    %v312 = vunpack.c.l.b16 %v84
    %v313 = vunpack.c.h.b16 %v84
    %v314 = vunpack.c.l.b16 %v85
    %v315 = vunpack.c.h.b16 %v85
    %v316 = vunpack.c.l.b16 %v86
    %v317 = vunpack.c.h.b16 %v86
    %v318 = vunpack.c.l.b16 %v87
    %v319 = vunpack.c.h.b16 %v87
    %v320 = vunpack.c.l.b16 %v88
    %v321 = vunpack.c.h.b16 %v88
    %v322 = vunpack.c.l.b16 %v89
    %v323 = vunpack.c.h.b16 %v89
    %v324 = vunpack.c.l.b16 %v90
    %v325 = vunpack.c.h.b16 %v90
    %v326 = vunpack.c.l.b16 %v91
    %v327 = vunpack.c.h.b16 %v91
    %v328 = vunpack.c.l.b16 %v92
    %v329 = vunpack.c.h.b16 %v92
    %v330 = vunpack.c.l.b16 %v93
    %v331 = vunpack.c.h.b16 %v93
    %v332 = vunpack.c.l.b16 %v94
    %v333 = vunpack.c.h.b16 %v94
    %v334 = vunpack.c.l.b16 %v95
    %v335 = vunpack.c.h.b16 %v95
    %v336 = vunpack.c.l.b16 %v96
    %v337 = vunpack.c.h.b16 %v96
    %v338 = vunpack.c.l.b16 %v97
    %v339 = vunpack.c.h.b16 %v97
    %v340 = vunpack.c.l.b16 %v98
    %v341 = vunpack.c.h.b16 %v98
    %v342 = vunpack.c.l.b16 %v99
    %v343 = vunpack.c.h.b16 %v99
    %v344 = vunpack.c.l.b16 %v100
    %v345 = vunpack.c.h.b16 %v100
    %v346 = vunpack.c.l.b16 %v101
    %v347 = vunpack.c.h.b16 %v101
    %v348 = vunpack.c.l.b16 %v102
    %v349 = vunpack.c.h.b16 %v102
    %v350 = vunpack.c.l.b16 %v103
    %v351 = vunpack.c.h.b16 %v103
    %v352 = vunpack.c.l.b16 %v104
    %v353 = vunpack.c.h.b16 %v104
    %v354 = vunpack.c.l.b16 %v105
    %v355 = vunpack.c.h.b16 %v105
    %v356 = vunpack.c.l.b16 %v106
    %v357 = vunpack.c.h.b16 %v106
    %v358 = vunpack.c.l.b16 %v107
    %v359 = vunpack.c.h.b16 %v107
    %v360 = vunpack.c.l.b16 %v108
    %v361 = vunpack.c.h.b16 %v108
    %v362 = vunpack.c.l.b16 %v109
    %v363 = vunpack.c.h.b16 %v109
    %v364 = vunpack.c.l.b16 %v110
    %v365 = vunpack.c.h.b16 %v110
    %v366 = vunpack.c.l.b16 %v111
    %v367 = vunpack.c.h.b16 %v111
    %v368 = vunpack.c.l.b16 %v112
    %v369 = vunpack.c.h.b16 %v112
    %v370 = vunpack.c.l.b16 %v113
    %v371 = vunpack.c.h.b16 %v113
    %v372 = vunpack.c.l.b16 %v114
    %v373 = vunpack.c.h.b16 %v114
    %v374 = vunpack.c.l.b16 %v115
    %v375 = vunpack.c.h.b16 %v115
    %v376 = vunpack.c.l.b16 %v116
    %v377 = vunpack.c.h.b16 %v116
    %v378 = vunpack.c.l.b16 %v117
    %v379 = vunpack.c.h.b16 %v117
    %v380 = vunpack.c.l.b16 %v118
    %v381 = vunpack.c.h.b16 %v118
    %v382 = vunpack.c.l.b16 %v119
    %v383 = vunpack.c.h.b16 %v119
    %v384 = vunpack.c.l.b16 %v120
    %v385 = vunpack.c.h.b16 %v120
    %v386 = vunpack.c.l.b16 %v121
    %v387 = vunpack.c.h.b16 %v121
    %v388 = vunpack.c.l.b16 %v122
    %v389 = vunpack.c.h.b16 %v122
    %v390 = vunpack.c.l.b16 %v123
    %v391 = vunpack.c.h.b16 %v123
    %v392 = vunpack.c.l.b16 %v124
    %v393 = vunpack.c.h.b16 %v124
    %v394 = vunpack.c.l.b16 %v125
    %v395 = vunpack.c.h.b16 %v125
    %v396 = vunpack.c.l.b16 %v126
    %v397 = vunpack.c.h.b16 %v126
    %v398 = vunpack.c.l.b16 %v127
    %v399 = vunpack.c.h.b16 %v127
    %v400 = vunpack.c.l.b16 %v128
    %v401 = vunpack.c.h.b16 %v128
    %v402 = vunpack.c.l.b16 %v129
    %v403 = vunpack.c.h.b16 %v129
    %v404 = vunpack.c.l.b16 %v130
    %v405 = vunpack.c.h.b16 %v130
    %v406 = vunpack.c.l.b16 %v131
    %v407 = vunpack.c.h.b16 %v131
    %v408 = vunpack.c.l.b16 %v132
    %v409 = vunpack.c.h.b16 %v132
    %v410 = vunpack.c.l.b16 %v133
    %v411 = vunpack.c.h.b16 %v133
    %v412 = vunpack.c.l.b16 %v134
    %v413 = vunpack.c.h.b16 %v134
    %v414 = vunpack.c.l.b16 %v135
    %v415 = vunpack.c.h.b16 %v135
    %v416 = vunpack.c.l.b16 %v136
    %v417 = vunpack.c.h.b16 %v136
    %v418 = vunpack.c.l.b16 %v137
    %v419 = vunpack.c.h.b16 %v137
    %v420 = vunpack.c.l.b16 %v138
    %v421 = vunpack.c.h.b16 %v138
    %v422 = vunpack.c.l.b16 %v139
    %v423 = vunpack.c.h.b16 %v139
    %v424 = vunpack.c.l.b16 %v140
    %v425 = vunpack.c.h.b16 %v140
    %v426 = vunpack.c.l.b16 %v141
    %v427 = vunpack.c.h.b16 %v141
    %v428 = vunpack.c.l.b16 %v142
    %v429 = vunpack.c.h.b16 %v142
    %v430 = vunpack.c.l.b16 %v143
    %v431 = vunpack.c.h.b16 %v143
    %v432 = vunpack.c.l.b16 %v144
    %v433 = vunpack.c.h.b16 %v144
    %v434 = vunpack.c.l.b16 %v145
    %v435 = vunpack.c.h.b16 %v145
    %v436 = vunpack.c.l.b16 %v146
    %v437 = vunpack.c.h.b16 %v146
    %v438 = vunpack.c.l.b16 %v147
    %v439 = vunpack.c.h.b16 %v147
    %v440 = vunpack.c.l.b16 %v148
    %v441 = vunpack.c.h.b16 %v148
    %v442 = vunpack.c.l.b16 %v149
    %v443 = vunpack.c.h.b16 %v149
    %v444 = vunpack.c.l.b16 %v150
    %v445 = vunpack.c.h.b16 %v150
    %v446 = vunpack.c.l.b16 %v151
    %v447 = vunpack.c.h.b16 %v151
    %v448 = vunpack.c.l.b16 %v152
    %v449 = vunpack.c.h.b16 %v152
    %v450 = vunpack.c.l.b16 %v153
    %v451 = vunpack.c.h.b16 %v153
    %v452 = vunpack.c.l.b16 %v154
    %v453 = vunpack.c.h.b16 %v154
    %v454 = vunpack.c.l.b16 %v155
    %v455 = vunpack.c.h.b16 %v155
    %v456 = vunpack.c.l.b16 %v156
    %v457 = vunpack.c.h.b16 %v156
    %v458 = vunpack.c.l.b16 %v157
    %v459 = vunpack.c.h.b16 %v157
    %v460 = vunpack.c.l.b16 %v158
    %v461 = vunpack.c.h.b16 %v158
    %v462 = vunpack.c.l.b16 %v159
    %v463 = vunpack.c.h.b16 %v159
    %v464 = vunpack.c.l.b16 %v160
    %v465 = vunpack.c.h.b16 %v160
    %v466 = vunpack.c.l.b16 %v161
    %v467 = vunpack.c.h.b16 %v161
    %v468 = vunpack.c.l.b16 %v162
    %v469 = vunpack.c.h.b16 %v162
    %v470 = vunpack.c.l.b16 %v163
    %v471 = vunpack.c.h.b16 %v163
    %v472 = vunpack.c.l.b16 %v164
    %v473 = vunpack.c.h.b16 %v164
    %v474 = vunpack.c.l.b16 %v165
    %v475 = vunpack.c.h.b16 %v165
    %v476 = vunpack.c.l.b16 %v166
    %v477 = vunpack.c.h.b16 %v166
    %v478 = vunpack.c.l.b16 %v167
    %v479 = vunpack.c.h.b16 %v167
    %v480 = vunpack.c.l.b16 %v168
    %v481 = vunpack.c.h.b16 %v168
    %v482 = vunpack.c.l.b16 %v169
    %v483 = vunpack.c.h.b16 %v169
    %v484 = vunpack.c.l.b16 %v170
    %v485 = vunpack.c.h.b16 %v170
    %v486 = vunpack.c.l.b16 %v171
    %v487 = vunpack.c.h.b16 %v171
    %v488 = vunpack.c.l.b16 %v172
    %v489 = vunpack.c.h.b16 %v172
    %v490 = vunpack.c.l.b16 %v173
    %v491 = vunpack.c.h.b16 %v173
    %v492 = vpack.c.b16 %v298, %v296
    %v493 = vpack.c.b16 %v299, %v297
    %v494 = vpack.c.b16 %v302, %v300
    %v495 = vpack.c.b16 %v303, %v301
    %v496 = vpack.c.b16 %v306, %v304
    %v497 = vpack.c.b16 %v307, %v305
    %v498 = vpack.c.b16 %v310, %v308
    %v499 = vpack.c.b16 %v311, %v309
    %v500 = vpack.c.b16 %v314, %v312
    %v501 = vpack.c.b16 %v315, %v313
    %v502 = vpack.c.b16 %v318, %v316
    %v503 = vpack.c.b16 %v319, %v317
    %v504 = vpack.c.b16 %v322, %v320
    %v505 = vpack.c.b16 %v323, %v321
    %v506 = vpack.c.b16 %v326, %v324
    %v507 = vpack.c.b16 %v327, %v325
    %v508 = vpack.c.b16 %v330, %v328
    %v509 = vpack.c.b16 %v331, %v329
    %v510 = vpack.c.b16 %v334, %v332
    %v511 = vpack.c.b16 %v335, %v333
    %v512 = vpack.c.b16 %v338, %v336
    %v513 = vpack.c.b16 %v339, %v337
    %v514 = vpack.c.b16 %v342, %v340
    %v515 = vpack.c.b16 %v343, %v341
    %v516 = vpack.c.b16 %v346, %v344
    %v517 = vpack.c.b16 %v347, %v345
    %v518 = vpack.c.b16 %v350, %v348
    %v519 = vpack.c.b16 %v351, %v349
    %v520 = vpack.c.b16 %v354, %v352
    %v521 = vpack.c.b16 %v355, %v353
    %v522 = vpack.c.b16 %v358, %v356
    %v523 = vpack.c.b16 %v359, %v357
    %v524 = vpack.c.b16 %v362, %v360
    %v525 = vpack.c.b16 %v363, %v361
    %v526 = vpack.c.b16 %v366, %v364
    %v527 = vpack.c.b16 %v367, %v365
    %v528 = vpack.c.b16 %v370, %v368
    %v529 = vpack.c.b16 %v371, %v369
    %v530 = vpack.c.b16 %v374, %v372
    %v531 = vpack.c.b16 %v375, %v373
    %v532 = vpack.c.b16 %v378, %v376
    %v533 = vpack.c.b16 %v379, %v377
    %v534 = vpack.c.b16 %v382, %v380
    %v535 = vpack.c.b16 %v383, %v381
    %v536 = vpack.c.b16 %v386, %v384
    %v537 = vpack.c.b16 %v387, %v385
    %v538 = vpack.c.b16 %v390, %v388
    %v539 = vpack.c.b16 %v391, %v389
    %v540 = vpack.c.b16 %v394, %v392
    %v541 = vpack.c.b16 %v395, %v393
    %v542 = vpack.c.b16 %v398, %v396
    %v543 = vpack.c.b16 %v399, %v397
    %v544 = vpack.c.b16 %v402, %v400
    %v545 = vpack.c.b16 %v403, %v401
    %v546 = vpack.c.b16 %v406, %v404
    %v547 = vpack.c.b16 %v407, %v405
    %v548 = vpack.c.b16 %v410, %v408
    %v549 = vpack.c.b16 %v411, %v409
    %v550 = vpack.c.b16 %v414, %v412
    %v551 = vpack.c.b16 %v415, %v413
    %v552 = vpack.c.b16 %v418, %v416
    %v553 = vpack.c.b16 %v419, %v417
    %v554 = vpack.c.b16 %v422, %v420
    %v555 = vpack.c.b16 %v423, %v421
    %v556 = vpack.c.b16 %v426, %v424
    %v557 = vpack.c.b16 %v427, %v425
    %v558 = vpack.c.b16 %v430, %v428
    %v559 = vpack.c.b16 %v431, %v429
    %v560 = vpack.c.b16 %v434, %v432
    %v561 = vpack.c.b16 %v435, %v433
    %v562 = vpack.c.b16 %v438, %v436
    %v563 = vpack.c.b16 %v439, %v437
    %v564 = vpack.c.b16 %v442, %v440
    %v565 = vpack.c.b16 %v443, %v441
    %v566 = vpack.c.b16 %v446, %v444
    %v567 = vpack.c.b16 %v447, %v445
    %v568 = vpack.c.b16 %v450, %v448
    %v569 = vpack.c.b16 %v451, %v449
    %v570 = vpack.c.b16 %v454, %v452
    %v571 = vpack.c.b16 %v455, %v453
    %v572 = vpack.c.b16 %v458, %v456
    %v573 = vpack.c.b16 %v459, %v457
    %v574 = vpack.c.b16 %v462, %v460
    %v575 = vpack.c.b16 %v463, %v461
    %v576 = vpack.c.b16 %v466, %v464
    %v577 = vpack.c.b16 %v467, %v465
    %v578 = vpack.c.b16 %v470, %v468
    %v579 = vpack.c.b16 %v471, %v469
    %v580 = vpack.c.b16 %v474, %v472
    %v581 = vpack.c.b16 %v475, %v473
    %v582 = vpack.c.b16 %v478, %v476
    %v583 = vpack.c.b16 %v479, %v477
    %v584 = vpack.c.b16 %v482, %v480
    %v585 = vpack.c.b16 %v483, %v481
    %v586 = vpack.c.b16 %v486, %v484
    %v587 = vpack.c.b16 %v487, %v485
    %v588 = vpack.c.b16 %v490, %v488
    %v589 = vpack.c.b16 %v491, %v489
    %vm688 = vcmask 130048
    %v690 = vsel %vm688, %v191, 0
    %692 = vmatprep.subr.bf16.mxu0 %v507
    %693 = vmatpush1.bf16.msra.mxu0 %v506
    %694 = vmatprep.subr.bf16.mxu0 %v505
    %695 = vmatpush1.bf16.msra.mxu0 %v504
    %696 = vmatprep.subr.bf16.mxu0 %v503
    %697 = vmatpush1.bf16.msra.mxu0 %v502
    %698 = vmatprep.subr.bf16.mxu0 %v501
    %699 = vmatpush1.bf16.msra.mxu0 %v500
    %700 = vmatprep.subr.bf16.mxu0 %v499
    %701 = vmatpush1.bf16.msra.mxu0 %v498
    %702 = vmatprep.subr.bf16.mxu0 %v497
    %703 = vmatpush1.bf16.msra.mxu0 %v496
    %704 = vmatprep.subr.bf16.mxu0 %v495
    %705 = vmatpush1.bf16.msra.mxu0 %v494
    %706 = vmatprep.subr.bf16.mxu0 %v493
    %707 = vmatpush1.bf16.msra.mxu0 %v492
    %708 = vmatprep.subr.bf16.mxu0 %v523
    %709 = vmatpush2.bf16.msra.mxu0 %v522
    %710 = vmatprep.subr.bf16.mxu0 %v521
    %711 = vmatpush2.bf16.msra.mxu0 %v520
    %712 = vmatprep.subr.bf16.mxu0 %v519
    %713 = vmatpush2.bf16.msra.mxu0 %v518
    %714 = vmatprep.subr.bf16.mxu0 %v517
    %715 = vmatpush2.bf16.msra.mxu0 %v516
    %716 = vmatprep.subr.bf16.mxu0 %v515
    %717 = vmatpush2.bf16.msra.mxu0 %v514
    %718 = vmatprep.subr.bf16.mxu0 %v513
    %719 = vmatpush2.bf16.msra.mxu0 %v512
    %720 = vmatprep.subr.bf16.mxu0 %v511
    %721 = vmatpush2.bf16.msra.mxu0 %v510
    %722 = vmatprep.subr.bf16.mxu0 %v509
    %723 = vmatpush2.bf16.msra.mxu0 %v508
    %724 = vmatprep.mubr.bf16.mxu0 %v186
    %725 = vmatmul.mubr.bf16.gmra.mxu0 %v185
    %v726 = vpop.f32.mrf.mxu0
    %v727 = vadd.f32 0.0, %v726
    %v728 = vpop.f32.mrf.mxu0
    %v729 = vadd.f32 0.0, %v728
    %v730 = vpop.f32.mrf.mxu0
    %v731 = vpop.f32.mrf.mxu0
    %732 = vdwg.mxu0
    %733 = vmatprep.subr.bf16.mxu0 %v539
    %734 = vmatpush1.bf16.msra.mxu0 %v538
    %735 = vmatprep.subr.bf16.mxu0 %v537
    %736 = vmatpush1.bf16.msra.mxu0 %v536
    %737 = vmatprep.subr.bf16.mxu0 %v535
    %738 = vmatpush1.bf16.msra.mxu0 %v534
    %739 = vmatprep.subr.bf16.mxu0 %v533
    %740 = vmatpush1.bf16.msra.mxu0 %v532
    %741 = vmatprep.subr.bf16.mxu0 %v531
    %742 = vmatpush1.bf16.msra.mxu0 %v530
    %743 = vmatprep.subr.bf16.mxu0 %v529
    %744 = vmatpush1.bf16.msra.mxu0 %v528
    %745 = vmatprep.subr.bf16.mxu0 %v527
    %746 = vmatpush1.bf16.msra.mxu0 %v526
    %747 = vmatprep.subr.bf16.mxu0 %v525
    %748 = vmatpush1.bf16.msra.mxu0 %v524
    %749 = vmatprep.subr.bf16.mxu0 %v555
    %750 = vmatpush2.bf16.msra.mxu0 %v554
    %751 = vmatprep.subr.bf16.mxu0 %v553
    %752 = vmatpush2.bf16.msra.mxu0 %v552
    %753 = vmatprep.subr.bf16.mxu0 %v551
    %754 = vmatpush2.bf16.msra.mxu0 %v550
    %755 = vmatprep.subr.bf16.mxu0 %v549
    %756 = vmatpush2.bf16.msra.mxu0 %v548
    %757 = vmatprep.subr.bf16.mxu0 %v547
    %758 = vmatpush2.bf16.msra.mxu0 %v546
    %759 = vmatprep.subr.bf16.mxu0 %v545
    %760 = vmatpush2.bf16.msra.mxu0 %v544
    %761 = vmatprep.subr.bf16.mxu0 %v543
    %762 = vmatpush2.bf16.msra.mxu0 %v542
    %763 = vmatprep.subr.bf16.mxu0 %v541
    %764 = vmatpush2.bf16.msra.mxu0 %v540
    %765 = vmatprep.mubr.bf16.mxu0 %v188
    %766 = vmatmul.mubr.bf16.gmra.mxu0 %v187
    %v767 = vpop.f32.mrf.mxu0
    %v768 = vadd.f32 %v727, %v767
    %v769 = vpop.f32.mrf.mxu0
    %v770 = vadd.f32 %v729, %v769
    %v771 = vpop.f32.mrf.mxu0
    %v772 = vpop.f32.mrf.mxu0
    %773 = vdwg.mxu0
    %774 = vmatprep.subr.bf16.mxu0 %v571
    %775 = vmatpush1.bf16.msra.mxu0 %v570
    %776 = vmatprep.subr.bf16.mxu0 %v569
    %777 = vmatpush1.bf16.msra.mxu0 %v568
    %778 = vmatprep.subr.bf16.mxu0 %v567
    %779 = vmatpush1.bf16.msra.mxu0 %v566
    %780 = vmatprep.subr.bf16.mxu0 %v565
    %781 = vmatpush1.bf16.msra.mxu0 %v564
    %782 = vmatprep.subr.bf16.mxu0 %v563
    %783 = vmatpush1.bf16.msra.mxu0 %v562
    %784 = vmatprep.subr.bf16.mxu0 %v561
    %785 = vmatpush1.bf16.msra.mxu0 %v560
    %786 = vmatprep.subr.bf16.mxu0 %v559
    %787 = vmatpush1.bf16.msra.mxu0 %v558
    %788 = vmatprep.subr.bf16.mxu0 %v557
    %789 = vmatpush1.bf16.msra.mxu0 %v556
    %790 = vmatprep.subr.bf16.mxu0 %v587
    %791 = vmatpush2.bf16.msra.mxu0 %v586
    %792 = vmatprep.subr.bf16.mxu0 %v585
    %793 = vmatpush2.bf16.msra.mxu0 %v584
    %794 = vmatprep.subr.bf16.mxu0 %v583
    %795 = vmatpush2.bf16.msra.mxu0 %v582
    %796 = vmatprep.subr.bf16.mxu0 %v581
    %797 = vmatpush2.bf16.msra.mxu0 %v580
    %798 = vmatprep.subr.bf16.mxu0 %v579
    %799 = vmatpush2.bf16.msra.mxu0 %v578
    %800 = vmatprep.subr.bf16.mxu0 %v577
    %801 = vmatpush2.bf16.msra.mxu0 %v576
    %802 = vmatprep.subr.bf16.mxu0 %v575
    %803 = vmatpush2.bf16.msra.mxu0 %v574
    %804 = vmatprep.subr.bf16.mxu0 %v573
    %805 = vmatpush2.bf16.msra.mxu0 %v572
    %806 = vmatprep.mubr.bf16.mxu0 %v190
    %807 = vmatmul.mubr.bf16.gmra.mxu0 %v189
    %v808 = vpop.f32.mrf.mxu0
    %v809 = vadd.f32 %v768, %v808
    %v810 = vpop.f32.mrf.mxu0
    %v811 = vadd.f32 %v770, %v810
    %v812 = vpop.f32.mrf.mxu0
    %v813 = vpop.f32.mrf.mxu0
    %814 = vdwg.mxu0
    %815 = vmatprep.subr.bf16.mxu0 0
    %816 = vmatpush1.bf16.msra.mxu0 0
    %817 = vmatprep.subr.bf16.mxu0 0
    %818 = vmatpush1.bf16.msra.mxu0 0
    %819 = vmatprep.subr.bf16.mxu0 0
    %820 = vmatpush1.bf16.msra.mxu0 0
    %821 = vmatprep.subr.bf16.mxu0 0
    %822 = vmatpush1.bf16.msra.mxu0 0
    %823 = vmatprep.subr.bf16.mxu0 0
    %824 = vmatpush1.bf16.msra.mxu0 0
    %825 = vmatprep.subr.bf16.mxu0 0
    %826 = vmatpush1.bf16.msra.mxu0 0
    %827 = vmatprep.subr.bf16.mxu0 0
    %828 = vmatpush1.bf16.msra.mxu0 0
    %829 = vmatprep.subr.bf16.mxu0 %v589
    %830 = vmatpush1.bf16.msra.mxu0 %v588
    %831 = vmatprep.subr.bf16.mxu0 0
    %832 = vmatpush2.bf16.msra.mxu0 0
    %833 = vmatprep.subr.bf16.mxu0 0
    %834 = vmatpush2.bf16.msra.mxu0 0
    %835 = vmatprep.subr.bf16.mxu0 0
    %836 = vmatpush2.bf16.msra.mxu0 0
    %837 = vmatprep.subr.bf16.mxu0 0
    %838 = vmatpush2.bf16.msra.mxu0 0
    %839 = vmatprep.subr.bf16.mxu0 0
    %840 = vmatpush2.bf16.msra.mxu0 0
    %841 = vmatprep.subr.bf16.mxu0 0
    %842 = vmatpush2.bf16.msra.mxu0 0
    %843 = vmatprep.subr.bf16.mxu0 0
    %844 = vmatpush2.bf16.msra.mxu0 0
    %845 = vmatprep.subr.bf16.mxu0 0
    %846 = vmatpush2.bf16.msra.mxu0 0
    %847 = vmatprep.mubr.bf16.mxu0 0
    %848 = vmatmul.mubr.bf16.gmra.mxu0 %v690
    %v849 = vpop.f32.mrf.mxu0
    %v850 = vadd.f32 %v809, %v849
    %v851 = vpop.f32.mrf.mxu0
    %v852 = vadd.f32 %v811, %v851
    %v853 = vpop.f32.mrf.mxu0
    %v854 = vpop.f32.mrf.mxu0
    %855 = vdwg.mxu0
    %v856 = vmax.f32 %v850, 0.0
    %v857 = vmax.f32 %v852, 0.0
    %v858 = vpack.c.bf16 %v856, %v856
    %v859 = vpack.c.bf16 %v857, %v857
    %v860 = vld [vmem:[#allocation7] sm:$0xff]
    %v861 = vld [vmem:[#allocation7 + $0x8] sm:$0xff]
    %v862 = vld [vmem:[#allocation7 + $0x10] sm:$0xff]
    %v863 = vld [vmem:[#allocation7 + $0x18] sm:$0xff]
    %v864 = vld [vmem:[#allocation7 + $0x20] sm:$0xff]
    %v865 = vld [vmem:[#allocation7 + $0x28] sm:$0xff]
    %v866 = vld [vmem:[#allocation7 + $0x30] sm:$0xff]
    %v867 = vld [vmem:[#allocation7 + $0x38] sm:$0xff]
    %v868 = vld [vmem:[#allocation7 + $0x40] sm:$0xff]
    %v869 = vld [vmem:[#allocation7 + $0x48] sm:$0xff]
    %v870 = vld [vmem:[#allocation7 + $0x50] sm:$0xff]
    %v871 = vld [vmem:[#allocation7 + $0x58] sm:$0xff]
    %v872 = vld [vmem:[#allocation7 + $0x60] sm:$0xff]
    %v873 = vld [vmem:[#allocation7 + $0x68] sm:$0xff]
    %v874 = vld [vmem:[#allocation7 + $0x70] sm:$0xff]
    %v875 = vld [vmem:[#allocation7 + $0x78] sm:$0xff]
    %v876 = vld [vmem:[#allocation7 + $0x80] sm:$0xff]
    %v877 = vld [vmem:[#allocation7 + $0x88] sm:$0xff]
    %v878 = vld [vmem:[#allocation7 + $0x90] sm:$0xff]
    %v879 = vld [vmem:[#allocation7 + $0x98] sm:$0xff]
    %v880 = vld [vmem:[#allocation7 + $0xa0] sm:$0xff]
    %v881 = vld [vmem:[#allocation7 + $0xa8] sm:$0xff]
    %v882 = vld [vmem:[#allocation7 + $0xb0] sm:$0xff]
    %v883 = vld [vmem:[#allocation7 + $0xb8] sm:$0xff]
    %v884 = vld [vmem:[#allocation7 + $0xc0] sm:$0xff]
    %v885 = vld [vmem:[#allocation7 + $0xc8] sm:$0xff]
    %v886 = vld [vmem:[#allocation7 + $0xd0] sm:$0xff]
    %v887 = vld [vmem:[#allocation7 + $0xd8] sm:$0xff]
    %v888 = vld [vmem:[#allocation7 + $0xe0] sm:$0xff]
    %v889 = vld [vmem:[#allocation7 + $0xe8] sm:$0xff]
    %v890 = vld [vmem:[#allocation7 + $0xf0] sm:$0xff]
    %v891 = vld [vmem:[#allocation7 + $0xf8] sm:$0xff]
    %v924 = vunpack.c.l.b16 %v860
    %v925 = vunpack.c.h.b16 %v860
    %v926 = vunpack.c.l.b16 %v861
    %v927 = vunpack.c.h.b16 %v861
    %v928 = vunpack.c.l.b16 %v862
    %v929 = vunpack.c.h.b16 %v862
    %v930 = vunpack.c.l.b16 %v863
    %v931 = vunpack.c.h.b16 %v863
    %v932 = vunpack.c.l.b16 %v864
    %v933 = vunpack.c.h.b16 %v864
    %v934 = vunpack.c.l.b16 %v865
    %v935 = vunpack.c.h.b16 %v865
    %v936 = vunpack.c.l.b16 %v866
    %v937 = vunpack.c.h.b16 %v866
    %v938 = vunpack.c.l.b16 %v867
    %v939 = vunpack.c.h.b16 %v867
    %v940 = vunpack.c.l.b16 %v868
    %v941 = vunpack.c.h.b16 %v868
    %v942 = vunpack.c.l.b16 %v869
    %v943 = vunpack.c.h.b16 %v869
    %v944 = vunpack.c.l.b16 %v870
    %v945 = vunpack.c.h.b16 %v870
    %v946 = vunpack.c.l.b16 %v871
    %v947 = vunpack.c.h.b16 %v871
    %v948 = vunpack.c.l.b16 %v872
    %v949 = vunpack.c.h.b16 %v872
    %v950 = vunpack.c.l.b16 %v873
    %v951 = vunpack.c.h.b16 %v873
    %v952 = vunpack.c.l.b16 %v874
    %v953 = vunpack.c.h.b16 %v874
    %v954 = vunpack.c.l.b16 %v875
    %v955 = vunpack.c.h.b16 %v875
    %v956 = vunpack.c.l.b16 %v876
    %v957 = vunpack.c.h.b16 %v876
    %v958 = vunpack.c.l.b16 %v877
    %v959 = vunpack.c.h.b16 %v877
    %v960 = vunpack.c.l.b16 %v878
    %v961 = vunpack.c.h.b16 %v878
    %v962 = vunpack.c.l.b16 %v879
    %v963 = vunpack.c.h.b16 %v879
    %v964 = vunpack.c.l.b16 %v880
    %v965 = vunpack.c.h.b16 %v880
    %v966 = vunpack.c.l.b16 %v881
    %v967 = vunpack.c.h.b16 %v881
    %v968 = vunpack.c.l.b16 %v882
    %v969 = vunpack.c.h.b16 %v882
    %v970 = vunpack.c.l.b16 %v883
    %v971 = vunpack.c.h.b16 %v883
    %v972 = vunpack.c.l.b16 %v884
    %v973 = vunpack.c.h.b16 %v884
    %v974 = vunpack.c.l.b16 %v885
    %v975 = vunpack.c.h.b16 %v885
    %v976 = vunpack.c.l.b16 %v886
    %v977 = vunpack.c.h.b16 %v886
    %v978 = vunpack.c.l.b16 %v887
    %v979 = vunpack.c.h.b16 %v887
    %v980 = vunpack.c.l.b16 %v888
    %v981 = vunpack.c.h.b16 %v888
    %v982 = vunpack.c.l.b16 %v889
    %v983 = vunpack.c.h.b16 %v889
    %v984 = vunpack.c.l.b16 %v890
    %v985 = vunpack.c.h.b16 %v890
    %v986 = vunpack.c.l.b16 %v891
    %v987 = vunpack.c.h.b16 %v891
    %v988 = vpack.c.b16 %v926, %v924
    %v989 = vpack.c.b16 %v927, %v925
    %v990 = vpack.c.b16 %v930, %v928
    %v991 = vpack.c.b16 %v931, %v929
    %v992 = vpack.c.b16 %v934, %v932
    %v993 = vpack.c.b16 %v935, %v933
    %v994 = vpack.c.b16 %v938, %v936
    %v995 = vpack.c.b16 %v939, %v937
    %v996 = vpack.c.b16 %v942, %v940
    %v997 = vpack.c.b16 %v943, %v941
    %v998 = vpack.c.b16 %v946, %v944
    %v999 = vpack.c.b16 %v947, %v945
    %v1000 = vpack.c.b16 %v950, %v948
    %v1001 = vpack.c.b16 %v951, %v949
    %v1002 = vpack.c.b16 %v954, %v952
    %v1003 = vpack.c.b16 %v955, %v953
    %v1004 = vpack.c.b16 %v958, %v956
    %v1005 = vpack.c.b16 %v959, %v957
    %v1006 = vpack.c.b16 %v962, %v960
    %v1007 = vpack.c.b16 %v963, %v961
    %v1008 = vpack.c.b16 %v966, %v964
    %v1009 = vpack.c.b16 %v967, %v965
    %v1010 = vpack.c.b16 %v970, %v968
    %v1011 = vpack.c.b16 %v971, %v969
    %v1012 = vpack.c.b16 %v974, %v972
    %v1013 = vpack.c.b16 %v975, %v973
    %v1014 = vpack.c.b16 %v978, %v976
    %v1015 = vpack.c.b16 %v979, %v977
    %v1016 = vpack.c.b16 %v982, %v980
    %v1017 = vpack.c.b16 %v983, %v981
    %v1018 = vpack.c.b16 %v986, %v984
    %v1019 = vpack.c.b16 %v987, %v985
    %1052 = vmatprep.subr.bf16.mxu0 %v1003
    %1053 = vmatpush1.bf16.msra.mxu0 %v1002
    %1054 = vmatprep.subr.bf16.mxu0 %v1001
    %1055 = vmatpush1.bf16.msra.mxu0 %v1000
    %1056 = vmatprep.subr.bf16.mxu0 %v999
    %1057 = vmatpush1.bf16.msra.mxu0 %v998
    %1058 = vmatprep.subr.bf16.mxu0 %v997
    %1059 = vmatpush1.bf16.msra.mxu0 %v996
    %1060 = vmatprep.subr.bf16.mxu0 %v995
    %1061 = vmatpush1.bf16.msra.mxu0 %v994
    %1062 = vmatprep.subr.bf16.mxu0 %v993
    %1063 = vmatpush1.bf16.msra.mxu0 %v992
    %1064 = vmatprep.subr.bf16.mxu0 %v991
    %1065 = vmatpush1.bf16.msra.mxu0 %v990
    %1066 = vmatprep.subr.bf16.mxu0 %v989
    %1067 = vmatpush1.bf16.msra.mxu0 %v988
    %1068 = vmatprep.subr.bf16.mxu0 %v1019
    %1069 = vmatpush2.bf16.msra.mxu0 %v1018
    %1070 = vmatprep.subr.bf16.mxu0 %v1017
    %1071 = vmatpush2.bf16.msra.mxu0 %v1016
    %1072 = vmatprep.subr.bf16.mxu0 %v1015
    %1073 = vmatpush2.bf16.msra.mxu0 %v1014
    %1074 = vmatprep.subr.bf16.mxu0 %v1013
    %1075 = vmatpush2.bf16.msra.mxu0 %v1012
    %1076 = vmatprep.subr.bf16.mxu0 %v1011
    %1077 = vmatpush2.bf16.msra.mxu0 %v1010
    %1078 = vmatprep.subr.bf16.mxu0 %v1009
    %1079 = vmatpush2.bf16.msra.mxu0 %v1008
    %1080 = vmatprep.subr.bf16.mxu0 %v1007
    %1081 = vmatpush2.bf16.msra.mxu0 %v1006
    %1082 = vmatprep.subr.bf16.mxu0 %v1005
    %1083 = vmatpush2.bf16.msra.mxu0 %v1004
    %1084 = vmatprep.mubr.bf16.mxu0 %v859
    %1085 = vmatmul.mubr.bf16.gmra.mxu0 %v858
    %v1086 = vpop.f32.mrf.mxu0
    %v1087 = vadd.f32 0.0, %v1086
    %v1088 = vpop.f32.mrf.mxu0
    %v1089 = vadd.f32 0.0, %v1088
    %v1090 = vpop.f32.mrf.mxu0
    %v1091 = vpop.f32.mrf.mxu0
    %1092 = vdwg.mxu0
    %v1093 = vmax.f32 %v1087, 0.0
    %v1094 = vmax.f32 %v1089, 0.0
    %v1095 = vpack.c.bf16 %v1093, %v1093
    %v1096 = vpack.c.bf16 %v1094, %v1094
    %v1097 = vld [vmem:[#allocation8] sm:$0xf]
    %v1098 = vld [vmem:[#allocation8 + $0x4] sm:$0xf]
    %v1099 = vld [vmem:[#allocation8 + $0x8] sm:$0xf]
    %v1100 = vld [vmem:[#allocation8 + $0xc] sm:$0xf]
    %v1101 = vld [vmem:[#allocation8 + $0x10] sm:$0xf]
    %v1102 = vld [vmem:[#allocation8 + $0x14] sm:$0xf]
    %v1103 = vld [vmem:[#allocation8 + $0x18] sm:$0xf]
    %v1104 = vld [vmem:[#allocation8 + $0x1c] sm:$0xf]
    %v1105 = vld [vmem:[#allocation8 + $0x20] sm:$0xf]
    %v1106 = vld [vmem:[#allocation8 + $0x24] sm:$0xf]
    %v1107 = vld [vmem:[#allocation8 + $0x28] sm:$0xf]
    %v1108 = vld [vmem:[#allocation8 + $0x2c] sm:$0xf]
    %v1109 = vld [vmem:[#allocation8 + $0x30] sm:$0xf]
    %v1110 = vld [vmem:[#allocation8 + $0x34] sm:$0xf]
    %v1111 = vld [vmem:[#allocation8 + $0x38] sm:$0xf]
    %v1112 = vld [vmem:[#allocation8 + $0x3c] sm:$0xf]
    %v1113 = vld [vmem:[#allocation8 + $0x40] sm:$0xf]
    %v1114 = vld [vmem:[#allocation8 + $0x44] sm:$0xf]
    %v1115 = vld [vmem:[#allocation8 + $0x48] sm:$0xf]
    %v1116 = vld [vmem:[#allocation8 + $0x4c] sm:$0xf]
    %v1117 = vld [vmem:[#allocation8 + $0x50] sm:$0xf]
    %v1118 = vld [vmem:[#allocation8 + $0x54] sm:$0xf]
    %v1119 = vld [vmem:[#allocation8 + $0x58] sm:$0xf]
    %v1120 = vld [vmem:[#allocation8 + $0x5c] sm:$0xf]
    %v1121 = vld [vmem:[#allocation8 + $0x60] sm:$0xf]
    %v1122 = vld [vmem:[#allocation8 + $0x64] sm:$0xf]
    %v1123 = vld [vmem:[#allocation8 + $0x68] sm:$0xf]
    %v1124 = vld [vmem:[#allocation8 + $0x6c] sm:$0xf]
    %v1125 = vld [vmem:[#allocation8 + $0x70] sm:$0xf]
    %v1126 = vld [vmem:[#allocation8 + $0x74] sm:$0xf]
    %v1127 = vld [vmem:[#allocation8 + $0x78] sm:$0xf]
    %v1128 = vld [vmem:[#allocation8 + $0x7c] sm:$0xf]
    %v1161 = vunpack.c.l.b16 %v1097
    %v1162 = vunpack.c.l.b16 %v1098
    %v1163 = vunpack.c.l.b16 %v1099
    %v1164 = vunpack.c.l.b16 %v1100
    %v1165 = vunpack.c.l.b16 %v1101
    %v1166 = vunpack.c.l.b16 %v1102
    %v1167 = vunpack.c.l.b16 %v1103
    %v1168 = vunpack.c.l.b16 %v1104
    %v1169 = vunpack.c.l.b16 %v1105
    %v1170 = vunpack.c.l.b16 %v1106
    %v1171 = vunpack.c.l.b16 %v1107
    %v1172 = vunpack.c.l.b16 %v1108
    %v1173 = vunpack.c.l.b16 %v1109
    %v1174 = vunpack.c.l.b16 %v1110
    %v1175 = vunpack.c.l.b16 %v1111
    %v1176 = vunpack.c.l.b16 %v1112
    %v1177 = vunpack.c.l.b16 %v1113
    %v1178 = vunpack.c.l.b16 %v1114
    %v1179 = vunpack.c.l.b16 %v1115
    %v1180 = vunpack.c.l.b16 %v1116
    %v1181 = vunpack.c.l.b16 %v1117
    %v1182 = vunpack.c.l.b16 %v1118
    %v1183 = vunpack.c.l.b16 %v1119
    %v1184 = vunpack.c.l.b16 %v1120
    %v1185 = vunpack.c.l.b16 %v1121
    %v1186 = vunpack.c.l.b16 %v1122
    %v1187 = vunpack.c.l.b16 %v1123
    %v1188 = vunpack.c.l.b16 %v1124
    %v1189 = vunpack.c.l.b16 %v1125
    %v1190 = vunpack.c.l.b16 %v1126
    %v1191 = vunpack.c.l.b16 %v1127
    %v1192 = vunpack.c.l.b16 %v1128
    %v1193 = vpack.c.b16 %v1162, %v1161
    %v1194 = vpack.c.b16 %v1164, %v1163
    %v1195 = vpack.c.b16 %v1166, %v1165
    %v1196 = vpack.c.b16 %v1168, %v1167
    %v1197 = vpack.c.b16 %v1170, %v1169
    %v1198 = vpack.c.b16 %v1172, %v1171
    %v1199 = vpack.c.b16 %v1174, %v1173
    %v1200 = vpack.c.b16 %v1176, %v1175
    %v1201 = vpack.c.b16 %v1178, %v1177
    %v1202 = vpack.c.b16 %v1180, %v1179
    %v1203 = vpack.c.b16 %v1182, %v1181
    %v1204 = vpack.c.b16 %v1184, %v1183
    %v1205 = vpack.c.b16 %v1186, %v1185
    %v1206 = vpack.c.b16 %v1188, %v1187
    %v1207 = vpack.c.b16 %v1190, %v1189
    %v1208 = vpack.c.b16 %v1192, %v1191
    %1225 = vmatprep.subr.bf16.mxu0 0
    %1226 = vmatpush1.bf16.msra.mxu0 %v1200
    %1227 = vmatprep.subr.bf16.mxu0 0
    %1228 = vmatpush1.bf16.msra.mxu0 %v1199
    %1229 = vmatprep.subr.bf16.mxu0 0
    %1230 = vmatpush1.bf16.msra.mxu0 %v1198
    %1231 = vmatprep.subr.bf16.mxu0 0
    %1232 = vmatpush1.bf16.msra.mxu0 %v1197
    %1233 = vmatprep.subr.bf16.mxu0 0
    %1234 = vmatpush1.bf16.msra.mxu0 %v1196
    %1235 = vmatprep.subr.bf16.mxu0 0
    %1236 = vmatpush1.bf16.msra.mxu0 %v1195
    %1237 = vmatprep.subr.bf16.mxu0 0
    %1238 = vmatpush1.bf16.msra.mxu0 %v1194
    %1239 = vmatprep.subr.bf16.mxu0 0
    %1240 = vmatpush1.bf16.msra.mxu0 %v1193
    %1241 = vmatprep.subr.bf16.mxu0 0
    %1242 = vmatpush2.bf16.msra.mxu0 %v1208
    %1243 = vmatprep.subr.bf16.mxu0 0
    %1244 = vmatpush2.bf16.msra.mxu0 %v1207
    %1245 = vmatprep.subr.bf16.mxu0 0
    %1246 = vmatpush2.bf16.msra.mxu0 %v1206
    %1247 = vmatprep.subr.bf16.mxu0 0
    %1248 = vmatpush2.bf16.msra.mxu0 %v1205
    %1249 = vmatprep.subr.bf16.mxu0 0
    %1250 = vmatpush2.bf16.msra.mxu0 %v1204
    %1251 = vmatprep.subr.bf16.mxu0 0
    %1252 = vmatpush2.bf16.msra.mxu0 %v1203
    %1253 = vmatprep.subr.bf16.mxu0 0
    %1254 = vmatpush2.bf16.msra.mxu0 %v1202
    %1255 = vmatprep.subr.bf16.mxu0 0
    %1256 = vmatpush2.bf16.msra.mxu0 %v1201
    %1257 = vmatprep.mubr.bf16.mxu0 %v1096
    %1258 = vmatmul.mubr.bf16.gmra.mxu0 %v1095
    %v1259 = vpop.f32.mrf.mxu0
    %v1260 = vadd.f32 0.0, %v1259
    %v1261 = vpop.f32.mrf.mxu0
    %v1262 = vpop.f32.mrf.mxu0
    %v1263 = vpop.f32.mrf.mxu0
    %1264 = vdwg.mxu0
    %v1265 = vpack.c.bf16 %v1260, %v1260
    %1266 = vst [vmem:[#allocation10] sm:$0xf] %v1265
    // Predicated region
    $region34: #{tpu_custom_call.1} parent=1 // pred_check
      _
    $region35: #{tpu_custom_call.1} parent=1 // pred_check_branch
      %1268 = sbr.rel (0) target = $region37
    $region36: #{tpu_custom_call.1} parent=1 // pred_region
      %s1270 = ssub.s32 64, 64
      %1271 = vsyncadd [#allocation4], %s1270
      %s1273 = sshll.u32 [#allocation10], 4
      %s1274 = int_to_ptr.vmem [resolvable:$true] %s1273
      %1276 = dma.vmem_to_hbm [thread:$0]  %s1274, 64, %s4, [#allocation4]
    $region37: #{tpu_custom_call.1} parent=1 // pred_fallthru
      _
    // Predicated region
    $region38: #{tpu_custom_call.1} parent=1 // pred_check
      _
    $region39: #{tpu_custom_call.1} parent=1 // pred_check_branch
      %1278 = sbr.rel (0) target = $region41
    $region40: #{tpu_custom_call.1} parent=1 // pred_region
      %1279 = dma.done [#allocation4], 64
    $region41: #{tpu_custom_call.1} parent=1 // pred_fallthru
      _
    %1280 = vsyncpa [#allocation3], 1
    %1281 = vsyncpa [#allocation6], 1
    %1282 = vsyncpa [#allocation9], 1
    %1283 = vsyncpa [#allocation4], 1

</llo_original>
